<compile_context>
chip_gen: v7x
topology: tpu7x:2x2x1
jax: 0.10.0
libtpu: 0.0.40
codegen_flags: <defaults>
</compile_context>

<pallas_src>
import jax
import jax.numpy as jnp
from jax.experimental import pallas as pl
from jax.experimental.pallas import tpu as pltpu


# ---------------------------------------------------------------------------
# Pass 1: stream X tiles; accumulate energy^T = X @ q^T into a (C, Q) scratch
# and the SE pooled partial sums; at the last tile convert to gamma * softmax.
# ---------------------------------------------------------------------------
def _energy_kernel(gamma_ref, x_ref, wq_ref, qs_ref, attn_ref, pool_ref, acc_ref):
    n = pl.program_id(1)

    @pl.when(n == 0)
    def _init():
        acc_ref[...] = jnp.zeros_like(acc_ref)
        pool_ref[...] = jnp.zeros_like(pool_ref)

    x = x_ref[0]                                                   # (C, tn) mxu dtype
    tn = x.shape[-1]

    # guided query: relu(BN-folded 1x1 conv), element-wise math kept in f32.
    q = jnp.maximum(
        jnp.dot(wq_ref[...], x, preferred_element_type=jnp.float32) + qs_ref[...],
        0.0)                                                       # (Q, tn) f32

    # energy^T accumulation: (C, tn) @ (tn, Q) -> (C, Q).  The per-tile MXU
    # transpose lands on the small q operand, not the (C, tn) x tile.  Single
    # fused accumulate so Mosaic can use in-place MXU accumulation (v7x MRB).
    acc_ref[...] += jax.lax.dot_general(
        x, q.astype(x.dtype), (((1,), (1,)), ((), ())),
        preferred_element_type=jnp.float32)

    # SE pooled partial sums: lane-group VPU adds only; the final cross-lane
    # reduce over the 128 columns is done once in the wrapper (no per-tile XLU
    # reduce, no lane-width-1 masked store).  Zero-padded columns add nothing.
    ps = x[:, 0:128].astype(jnp.float32)
    for j in range(1, tn // 128):
        ps = ps + x[:, j * 128:(j + 1) * 128].astype(jnp.float32)
    pool_ref[0] += ps

    @pl.when(n == pl.num_programs(1) - 1)
    def _finalize():
        energy = acc_ref[...].T                                    # (Q, C): once per batch
        # softmax(rowmax(E) - E) == exp(rowmin(E) - E) / sum(...)  (exact fusion)
        e_min = jnp.min(energy, axis=-1, keepdims=True)
        e = jnp.exp(e_min - energy)
        attn = e * pl.reciprocal(jnp.sum(e, axis=-1, keepdims=True), approx=False)
        # Fold gamma into the (Q, C) attention instead of the (Q, N) output.
        attn_ref[0] = (gamma_ref[0] * attn).astype(attn_ref.dtype)


# ---------------------------------------------------------------------------
# Pass 2: stream X tiles again; ONE stacked matmul per tile
#   y = [gamma*attn ; Wq ; (1+se)*Wp] @ x + [0 ; q_shift ; (1+se)*p_shift]
#   out = y_cam + relu(y_q) + relu(y_bottle)
# ---------------------------------------------------------------------------
def _output_kernel(lhs_ref, shift_ref, x_ref, o_ref):
    qp = lhs_ref.shape[-2] // 3
    x = x_ref[0]                                                   # (C, tn) mxu dtype
    y = jnp.dot(lhs_ref[0], x, preferred_element_type=jnp.float32) + shift_ref[0]
    cam = y[0:qp]                                                  # gamma * attn @ x
    q = jnp.maximum(y[qp:2 * qp], 0.0)                             # guided query
    bottle = jnp.maximum(y[2 * qp:3 * qp], 0.0)                    # (1+se)*project branch
    o_ref[0] = (cam + q + bottle).astype(o_ref.dtype)


def _fold_bn(w, bn_w, bn_b, bn_m, bn_v, eps=1e-5):
    """Fold eval-mode BatchNorm2d into the preceding bias-free 1x1 conv."""
    scale = bn_w / jnp.sqrt(bn_v + eps)
    w_eff = (w * scale[:, None]).astype(jnp.float32)               # (Cout, Cin)
    shift = ((bn_b - bn_m * scale)[:, None]).astype(jnp.float32)   # (Cout, 1)
    return w_eff, shift


def _round_up(a, m):
    return ((a + m - 1) // m) * m


def _vmem_and_tile():
    """Generation-aware (vmem_limit_bytes, lane-tile).  Leave headroom on v7x
    (64 MiB physical / TC); exploit the 128 MiB VMEM of v5e/v6e with tn=1024."""
    cap = 64 * 1024 * 1024
    try:
        cap = pltpu.get_tpu_info().vmem_capacity_bytes
    except Exception:
        pass
    if cap >= 100 * 1024 * 1024:          # v5e / v6e
        return 96 * 1024 * 1024, 1024
    return 48 * 1024 * 1024, 512          # v7x / unknown: conservative headroom


def guided_se_cam_module(x, params, *, mxu_dtype=jnp.bfloat16):
    """x: (B, C, H, W) float32.  mxu_dtype: operand dtype fed to the MXU
    (bf16 default for ~3x MXU throughput; jnp.float32 for exactness)."""
    B, C, H, W = x.shape
    wq_eff, q_shift = _fold_bn(params["wq"], params["bnq_w"], params["bnq_b"],
                               params["bnq_m"], params["bnq_v"])
    wp_eff, p_shift = _fold_bn(params["wp"], params["bnp_w"], params["bnp_b"],
                               params["bnp_m"], params["bnp_v"])
    Q = wq_eff.shape[0]
    O = wp_eff.shape[0]
    assert Q == O, "guided_SE_CAM_Module requires query_dim == out_dim"

    N = H * W
    vmem_limit, tn_max = _vmem_and_tile()
    tn = min(tn_max, _round_up(N, 128))       # lane-dense spatial tile
    N_pad = _round_up(N, tn)
    NT = N_pad // tn

    x_flat = x.reshape(B, C, N)
    if N_pad != N:
        x_flat = jnp.pad(x_flat, ((0, 0), (0, 0), (0, N_pad - N)))
    x_flat = x_flat.astype(mxu_dtype)          # halved HBM stream when bf16
    gamma_arr = params["gamma"].astype(jnp.float32).reshape((1,))

    # ---- Pass 1: energy/attention + SE pooled partial sums ------------------
    attn_scaled, pool128 = pl.pallas_call(
        _energy_kernel,
        out_shape=(jax.ShapeDtypeStruct((B, Q, C), mxu_dtype),
                   jax.ShapeDtypeStruct((B, C, 128), jnp.float32)),
        grid=(B, NT),
        in_specs=[
            pl.BlockSpec(memory_space=pltpu.MemorySpace.SMEM),        # gamma scalar
            pl.BlockSpec((1, C, tn), lambda b, n: (b, 0, n)),         # x tile
            pl.BlockSpec((Q, C), lambda b, n: (0, 0)),                # BN-folded Wq
            pl.BlockSpec((Q, 1), lambda b, n: (0, 0)),                # BN shift
        ],
        out_specs=(
            pl.BlockSpec((1, Q, C), lambda b, n: (b, 0, 0)),          # gamma*softmax
            pl.BlockSpec((1, C, 128), lambda b, n: (b, 0, 0)),        # pooled partials
        ),
        scratch_shapes=[pltpu.VMEM((C, Q), jnp.float32)],             # energy^T acc
        compiler_params=pltpu.CompilerParams(
            dimension_semantics=("parallel", "arbitrary"),
            vmem_limit_bytes=vmem_limit),
    )(gamma_arr, x_flat, wq_eff.astype(mxu_dtype), q_shift)

    # SE squeeze-excite MLP on the pooled (B, C) vector: O(C^2/16) work in plain
    # JAX (negligible vs. the streamed O(C*Q*N) kernels).
    pooled = jnp.sum(pool128, axis=-1) * (1.0 / float(N))             # (B, C)
    h = jax.nn.relu(pooled @ params["w1"].T + params["b1"])           # (B, C//16)
    se = jax.nn.sigmoid(h @ params["w2"].T + params["b2"])            # (B, O)
    se1 = (se + 1.0).astype(jnp.float32)                              # (B, O)

    # ---- Build the stacked pass-2 LHS / shifts (per batch) ------------------
    Qp = _round_up(Q, 8)                       # sublane-aligned chunk height

    def _pad_rows(a, rows):
        pad = rows - a.shape[-2]
        if pad:
            cfg = [(0, 0)] * (a.ndim - 2) + [(0, pad), (0, 0)]
            a = jnp.pad(a, cfg)
        return a

    # Fold (1 + se) into the project branch (1+sigmoid > 0 commutes with ReLU).
    wp_b = se1[:, :, None] * wp_eff[None, :, :]                       # (B, O, C)
    ps_b = se1[:, :, None] * p_shift[None, :, :]                      # (B, O, 1)

    lhs = jnp.concatenate(
        [_pad_rows(attn_scaled.astype(mxu_dtype), Qp),
         jnp.broadcast_to(_pad_rows(wq_eff, Qp).astype(mxu_dtype)[None], (B, Qp, C)),
         _pad_rows(wp_b, Qp).astype(mxu_dtype)],
        axis=1)                                                       # (B, 3Qp, C)

    shift = jnp.concatenate(
        [jnp.zeros((B, Qp, 1), jnp.float32),
         jnp.broadcast_to(_pad_rows(q_shift, Qp)[None], (B, Qp, 1)),
         _pad_rows(ps_b, Qp)],
        axis=1)                                                       # (B, 3Qp, 1)

    # ---- Pass 2: fused output ------------------------------------------------
    out_pad = pl.pallas_call(
        _output_kernel,
        out_shape=jax.ShapeDtypeStruct((B, Qp, N_pad), x.dtype),
        grid=(B, NT),
        in_specs=[
            pl.BlockSpec((1, 3 * Qp, C), lambda b, n: (b, 0, 0)),     # stacked LHS
            pl.BlockSpec((1, 3 * Qp, 1), lambda b, n: (b, 0, 0)),     # stacked shifts
            pl.BlockSpec((1, C, tn), lambda b, n: (b, 0, n)),         # x tile
        ],
        out_specs=pl.BlockSpec((1, Qp, tn), lambda b, n: (b, 0, n)),
        compiler_params=pltpu.CompilerParams(
            dimension_semantics=("parallel", "parallel"),
            vmem_limit_bytes=vmem_limit),
    )(lhs, shift, x_flat)

    return out_pad[:, :Q, :N].reshape(B, Q, H, W)


# ---------------------------------------------------------------------------
# Pure-JAX reference mirroring the PyTorch forward in eval mode.
# TODO(synk): Dropout2d is treated as identity (inference); training-mode channel
#             dropout / batch-statistics BN would need in-kernel RNG & batch stats.
# ---------------------------------------------------------------------------
def guided_se_cam_reference(x, params, eps=1e-5):
    B, C, H, W = x.shape
    N = H * W

    def conv1x1(inp, w):
        return jnp.einsum('oc,bchw->bohw', w, inp)

    def bn_eval(y, w, b, m, v):
        s = w / jnp.sqrt(v + eps)
        return y * s[None, :, None, None] + (b - m * s)[None, :, None, None]

    q = jax.nn.relu(bn_eval(conv1x1(x, params["wq"]),
                            params["bnq_w"], params["bnq_b"],
                            params["bnq_m"], params["bnq_v"]))
    key = x.reshape(B, C, N)
    energy = jnp.einsum('bqn,bcn->bqc', q.reshape(B, -1, N), key)
    energy_new = jnp.max(energy, axis=-1, keepdims=True) - energy
    attn = jax.nn.softmax(energy_new, axis=-1)
    out_c = jnp.einsum('bqc,bcn->bqn', attn, key).reshape(B, -1, H, W)
    gcam = params["gamma"].reshape(()) * out_c + q

    bottle = jax.nn.relu(bn_eval(conv1x1(x, params["wp"]),
                                 params["bnp_w"], params["bnp_b"],
                                 params["bnp_m"], params["bnp_v"]))

    pooled = jnp.mean(x, axis=(2, 3))
    h = jax.nn.relu(pooled @ params["w1"].T + params["b1"])
    se = jax.nn.sigmoid(h @ params["w2"].T + params["b2"])
    se_bottle = se[:, :, None, None] * bottle + bottle
    return gcam + se_bottle


if __name__ == "__main__":
    key = jax.random.PRNGKey(0)
    B, C, H, W = 2, 64, 16, 16        # in_dim = 64 (needs in_dim // 16 >= 1)
    Q = O = 32                        # query_dim == out_dim
    C16 = C // 16
    ks = jax.random.split(key, 16)

    x = jax.random.normal(ks[0], (B, C, H, W), dtype=jnp.float32)
    params = {
        "wq": 0.1 * jax.random.normal(ks[1], (Q, C), dtype=jnp.float32),
        "bnq_w": 1.0 + 0.1 * jax.random.normal(ks[2], (Q,), dtype=jnp.float32),
        "bnq_b": 0.1 * jax.random.normal(ks[3], (Q,), dtype=jnp.float32),
        "bnq_m": 0.1 * jax.random.normal(ks[4], (Q,), dtype=jnp.float32),
        "bnq_v": 0.5 + 0.5 * jnp.abs(jax.random.normal(ks[5], (Q,), dtype=jnp.float32)),
        "gamma": jnp.zeros((1,), dtype=jnp.float32),     # module init: zeros(1)
        "wp": 0.1 * jax.random.normal(ks[6], (O, C), dtype=jnp.float32),
        "bnp_w": 1.0 + 0.1 * jax.random.normal(ks[7], (O,), dtype=jnp.float32),
        "bnp_b": 0.1 * jax.random.normal(ks[8], (O,), dtype=jnp.float32),
        "bnp_m": 0.1 * jax.random.normal(ks[9], (O,), dtype=jnp.float32),
        "bnp_v": 0.5 + 0.5 * jnp.abs(jax.random.normal(ks[10], (O,), dtype=jnp.float32)),
        "w1": 0.1 * jax.random.normal(ks[11], (C16, C), dtype=jnp.float32),
        "b1": 0.1 * jax.random.normal(ks[12], (C16,), dtype=jnp.float32),
        "w2": 0.1 * jax.random.normal(ks[13], (O, C16), dtype=jnp.float32),
        "b2": 0.1 * jax.random.normal(ks[14], (O,), dtype=jnp.float32),
    }

    # --- f32 MXU mode: strict semantic check vs. the f32 reference ----------
    out = jax.block_until_ready(guided_se_cam_module(x, params, mxu_dtype=jnp.float32))
    ref = guided_se_cam_reference(x, params)
    assert out.shape == (B, O, H, W)
    assert jnp.allclose(out, ref, atol=1e-3, rtol=1e-3), \
        float(jnp.max(jnp.abs(out - ref)))

    params2 = dict(params, gamma=jnp.full((1,), 0.5, dtype=jnp.float32))
    out2 = jax.block_until_ready(guided_se_cam_module(x, params2, mxu_dtype=jnp.float32))
    ref2 = guided_se_cam_reference(x, params2)
    assert jnp.allclose(out2, ref2, atol=1e-3, rtol=1e-3), \
        float(jnp.max(jnp.abs(out2 - ref2)))

    # --- bf16 MXU mode (default, perf path): looser tolerance ----------------
    # softmax attention amplifies the bf16 input rounding, so only a sanity-level
    # tolerance is meaningful against the f32 reference here.
    out2_bf16 = jax.block_until_ready(guided_se_cam_module(x, params2))
    err = jnp.abs(out2_bf16.astype(jnp.float32) - ref2)
    assert out2_bf16.shape == (B, O, H, W)
    assert float(jnp.mean(err)) < 5e-2 and float(jnp.max(err)) < 4e-1, \
        (float(jnp.mean(err)), float(jnp.max(err)))

    print("KERNEL_OK")
</pallas_src>

<mosaic_0001>
module attributes {stable_mosaic.version = 11 : i64} {
  func.func @_energy_kernel(%arg0: i32, %arg1: i32, %arg2: memref<1xf32, #tpu.memory_space<smem>>, %arg3: memref<1x64x256xf32, #tpu.memory_space<vmem>>, %arg4: memref<32x64xf32, #tpu.memory_space<vmem>>, %arg5: memref<32x1xf32, #tpu.memory_space<vmem>>, %arg6: memref<1x32x64xf32, #tpu.memory_space<vmem>>, %arg7: memref<1x64x128xf32, #tpu.memory_space<vmem>>, %arg8: memref<64x32xf32, #tpu.memory_space<vmem>>) attributes {dimension_semantics = [#tpu.dimension_semantics<parallel>, #tpu.dimension_semantics<arbitrary>], iteration_bounds = array<i64: 2, 1>, scalar_prefetch = 0 : i64, scratch_operands = 1 : i64, tpu.core_type = #tpu.core_type<tc>, window_params = [{transform_indices = @transform_0, window_bounds = array<i64: 1>}, {transform_indices = @transform_1, window_bounds = array<i64: 1, 64, 256>}, {pipeline_mode = #tpu.pipeline_mode<synchronous>, transform_indices = @transform_2, window_bounds = array<i64: 32, 64>}, {pipeline_mode = #tpu.pipeline_mode<synchronous>, transform_indices = @transform_3, window_bounds = array<i64: 32, 1>}, {transform_indices = @transform_4, window_bounds = array<i64: 1, 32, 64>}, {transform_indices = @transform_5, window_bounds = array<i64: 1, 64, 128>}]} {
    %c0_i32 = arith.constant 0 : i32
    %0 = arith.cmpi eq, %arg1, %c0_i32 : i32
    %1 = arith.extui %0 : i1 to i32
    %c0_i32_0 = arith.constant 0 : i32
    %2 = arith.cmpi ne, %1, %c0_i32_0 : i32
    scf.if %2 {
      %cst_21 = arith.constant 0.000000e+00 : f32
      %28 = vector.broadcast %cst_21 : f32 to vector<64x32xf32>
      %c0_22 = arith.constant 0 : index
      %c0_23 = arith.constant 0 : index
      %29 = vector.load %arg8[%c0_22, %c0_23] : memref<64x32xf32, #tpu.memory_space<vmem>>, vector<64x32xf32>
      tpu.vector_store %arg8[%c0_22, %c0_23], %28 {strides = array<i32>} : memref<64x32xf32, #tpu.memory_space<vmem>>, vector<64x32xf32>,
      %cst_24 = arith.constant 0.000000e+00 : f32
      %30 = vector.broadcast %cst_24 : f32 to vector<1x64x128xf32>
      %c0_25 = arith.constant 0 : index
      %c0_26 = arith.constant 0 : index
      %c0_27 = arith.constant 0 : index
      %31 = vector.load %arg7[%c0_25, %c0_26, %c0_27] : memref<1x64x128xf32, #tpu.memory_space<vmem>>, vector<1x64x128xf32>
      tpu.vector_store %arg7[%c0_25, %c0_26, %c0_27], %30 {strides = array<i32>} : memref<1x64x128xf32, #tpu.memory_space<vmem>>, vector<1x64x128xf32>,
    } else {
    }
    %c0 = arith.constant 0 : index
    %c0_1 = arith.constant 0 : index
    %c0_2 = arith.constant 0 : index
    %3 = vector.load %arg3[%c0, %c0_1, %c0_2] : memref<1x64x256xf32, #tpu.memory_space<vmem>>, vector<1x64x256xf32>
    %4 = vector.shape_cast %3 : vector<1x64x256xf32> to vector<64x256xf32>
    %c0_3 = arith.constant 0 : index
    %c0_4 = arith.constant 0 : index
    %5 = vector.load %arg4[%c0_3, %c0_4] : memref<32x64xf32, #tpu.memory_space<vmem>>, vector<32x64xf32>
    %cst = arith.constant dense<0.000000e+00> : vector<32x256xf32>
    %6 = tpu.matmul %5, %4, %cst {dimension_numbers = #tpu.dot_dimension_numbers<[1], [0], [0], [1], [0, 0, 1, 1], [], []>} : vector<32x64xf32>, vector<64x256xf32>, vector<32x256xf32> -> vector<32x256xf32>
    %c0_5 = arith.constant 0 : index
    %c0_6 = arith.constant 0 : index
    %7 = vector.load %arg5[%c0_5, %c0_6] : memref<32x1xf32, #tpu.memory_space<vmem>>, vector<32x1xf32>
    %8 = vector.broadcast %7 : vector<32x1xf32> to vector<32x256xf32>
    %9 = arith.addf %6, %8 : vector<32x256xf32>
    %cst_7 = arith.constant 0.000000e+00 : f32
    %10 = vector.broadcast %cst_7 : f32 to vector<32x256xf32>
    %11 = arith.maximumf %9, %10 : vector<32x256xf32>
    %c0_8 = arith.constant 0 : index
    %c0_9 = arith.constant 0 : index
    %12 = vector.load %arg8[%c0_8, %c0_9] : memref<64x32xf32, #tpu.memory_space<vmem>>, vector<64x32xf32>
    %cst_10 = arith.constant dense<0.000000e+00> : vector<64x32xf32>
    %13 = tpu.matmul %4, %11, %cst_10 {dimension_numbers = #tpu.dot_dimension_numbers<[1], [1], [0], [0], [0, 0, 1, 0], [], []>} : vector<64x256xf32>, vector<32x256xf32>, vector<64x32xf32> -> vector<64x32xf32>
    %14 = arith.addf %12, %13 : vector<64x32xf32>
    %c0_11 = arith.constant 0 : index
    %c0_12 = arith.constant 0 : index
    %15 = vector.load %arg8[%c0_11, %c0_12] : memref<64x32xf32, #tpu.memory_space<vmem>>, vector<64x32xf32>
    tpu.vector_store %arg8[%c0_11, %c0_12], %14 {strides = array<i32>} : memref<64x32xf32, #tpu.memory_space<vmem>>, vector<64x32xf32>,
    %16 = vector.extract_strided_slice %4 {offsets = [0, 0], sizes = [64, 128], strides = [1, 1]} : vector<64x256xf32> to vector<64x128xf32>
    %17 = vector.extract_strided_slice %4 {offsets = [0, 128], sizes = [64, 128], strides = [1, 1]} : vector<64x256xf32> to vector<64x128xf32>
    %18 = arith.addf %16, %17 : vector<64x128xf32>
    %c0_13 = arith.constant 0 : index
    %c0_14 = arith.constant 0 : index
    %c0_15 = arith.constant 0 : index
    %19 = vector.load %arg7[%c0_13, %c0_14, %c0_15] : memref<1x64x128xf32, #tpu.memory_space<vmem>>, vector<1x64x128xf32>
    %20 = vector.shape_cast %19 : vector<1x64x128xf32> to vector<64x128xf32>
    %21 = arith.addf %20, %18 : vector<64x128xf32>
    %c0_16 = arith.constant 0 : index
    %c0_17 = arith.constant 0 : index
    %c0_18 = arith.constant 0 : index
    %22 = vector.load %arg7[%c0_16, %c0_17, %c0_18] : memref<1x64x128xf32, #tpu.memory_space<vmem>>, vector<1x64x128xf32>
    %23 = vector.shape_cast %22 : vector<1x64x128xf32> to vector<64x128xf32>
    %24 = vector.shape_cast %21 : vector<64x128xf32> to vector<1x64x128xf32>
    tpu.vector_store %arg7[%c0_16, %c0_17, %c0_18], %24 {strides = array<i32>} : memref<1x64x128xf32, #tpu.memory_space<vmem>>, vector<1x64x128xf32>,
    %c0_i32_19 = arith.constant 0 : i32
    %25 = arith.cmpi eq, %arg1, %c0_i32_19 : i32
    %26 = arith.extui %25 : i1 to i32
    %c0_i32_20 = arith.constant 0 : i32
    %27 = arith.cmpi ne, %26, %c0_i32_20 : i32
    scf.if %27 {
      %c0_21 = arith.constant 0 : index
      %c0_22 = arith.constant 0 : index
      %28 = vector.load %arg8[%c0_21, %c0_22] : memref<64x32xf32, #tpu.memory_space<vmem>>, vector<64x32xf32>
      %29 = tpu.transpose %28, [1, 0] : vector<64x32xf32> -> vector<32x64xf32>
      %cst_23 = arith.constant dense<0x7F800000> : vector<32xf32>
      %30 = vector.multi_reduction <minimumf>, %29, %cst_23 [1] : vector<32x64xf32> to vector<32xf32>
      %31 = vector.shape_cast %30 : vector<32xf32> to vector<32x1xf32>
      %32 = vector.broadcast %31 : vector<32x1xf32> to vector<32x64xf32>
      %33 = arith.subf %32, %29 : vector<32x64xf32>
      %34 = math.exp %33 : vector<32x64xf32>
      %cst_24 = arith.constant dense<0.000000e+00> : vector<32xf32>
      %35 = vector.multi_reduction <add>, %34, %cst_24 [1] : vector<32x64xf32> to vector<32xf32>
      %36 = vector.shape_cast %35 : vector<32xf32> to vector<32x1xf32>
      %37 = tpu.reciprocal %36 : vector<32x1xf32> -> vector<32x1xf32>
      %38 = vector.broadcast %37 : vector<32x1xf32> to vector<32x64xf32>
      %39 = arith.mulf %34, %38 : vector<32x64xf32>
      %c0_25 = arith.constant 0 : index
      %40 = memref.load %arg2[%c0_25] : memref<1xf32, #tpu.memory_space<smem>>
      %41 = vector.broadcast %40 : f32 to vector<32x64xf32>
      %42 = arith.mulf %41, %39 : vector<32x64xf32>
      %c0_26 = arith.constant 0 : index
      %c0_27 = arith.constant 0 : index
      %c0_28 = arith.constant 0 : index
      %43 = vector.load %arg6[%c0_26, %c0_27, %c0_28] : memref<1x32x64xf32, #tpu.memory_space<vmem>>, vector<1x32x64xf32>
      %44 = vector.shape_cast %43 : vector<1x32x64xf32> to vector<32x64xf32>
      %45 = vector.shape_cast %42 : vector<32x64xf32> to vector<1x32x64xf32>
      tpu.vector_store %arg6[%c0_26, %c0_27, %c0_28], %45 {strides = array<i32>} : memref<1x32x64xf32, #tpu.memory_space<vmem>>, vector<1x32x64xf32>,
    } else {
    }
    return
  }
  func.func @transform_0(%arg0: i32, %arg1: i32) -> i32 {
    %c0_i32 = arith.constant 0 : i32
    %c0_i32_0 = arith.constant 0 : i32
    return %c0_i32 : i32
  }
  func.func @transform_1(%arg0: i32, %arg1: i32) -> (i32, i32, i32) {
    %c0_i32 = arith.constant 0 : i32
    %c0_i32_0 = arith.constant 0 : i32
    return %arg0, %c0_i32, %arg1 : i32, i32, i32
  }
  func.func @transform_2(%arg0: i32, %arg1: i32) -> (i32, i32) {
    %c0_i32 = arith.constant 0 : i32
    %c0_i32_0 = arith.constant 0 : i32
    %c0_i32_1 = arith.constant 0 : i32
    return %c0_i32, %c0_i32_0 : i32, i32
  }
  func.func @transform_3(%arg0: i32, %arg1: i32) -> (i32, i32) {
    %c0_i32 = arith.constant 0 : i32
    %c0_i32_0 = arith.constant 0 : i32
    %c0_i32_1 = arith.constant 0 : i32
    return %c0_i32, %c0_i32_0 : i32, i32
  }
  func.func @transform_4(%arg0: i32, %arg1: i32) -> (i32, i32, i32) {
    %c0_i32 = arith.constant 0 : i32
    %c0_i32_0 = arith.constant 0 : i32
    %c0_i32_1 = arith.constant 0 : i32
    return %arg0, %c0_i32, %c0_i32_0 : i32, i32, i32
  }
  func.func @transform_5(%arg0: i32, %arg1: i32) -> (i32, i32, i32) {
    %c0_i32 = arith.constant 0 : i32
    %c0_i32_0 = arith.constant 0 : i32
    %c0_i32_1 = arith.constant 0 : i32
    return %arg0, %c0_i32, %c0_i32_0 : i32, i32, i32
  }
}

</mosaic_0001>

<llo_original>
// kernel: tpu_custom_call.1
$region0: #{tpu_custom_call.1}
  #allocation0 [shape = 'u32[]', space=smem, size = 0x4, offset = 0x4, fixed_abs, tag = 'smem constant byte address 0x4 - core index']
  #allocation1 [shape = 'u32[144,128]{1,0:T(1,128)}', space=vmem, size = 0x12000, scoped, tag = 'internal scratch']
  #allocation2 [shape = 'f32[64,32]{1,0:T(8,128)}', space=vmem, size = 0x8000, scoped, tag = 'scratch operand']
  #allocation3 [shape = 'f32[1]{0:T(128)S(6)}', space=smem, size = 0x200, scoped, tag = 'scoped memory for tpu_custom_call.1']
  %s0 = inlined_call_operand.<no memory space> [shape: f32[1], index: 0, kind: input, shape index: {}]
  %s1 = inlined_call_operand.hbm [shape: f32[2,64,256], index: 1, kind: input, shape index: {}]
  %s2 = inlined_call_operand.vmem [shape: f32[32,64], index: 2, kind: input, shape index: {}]
  %s3 = inlined_call_operand.vmem [shape: f32[32,1], index: 3, kind: input, shape index: {}]
  %s4 = inlined_call_operand.hbm [shape: f32[2,32,64], index: 4, kind: output, shape index: {0}]
  %s5 = inlined_call_operand.hbm [shape: f32[2,64,128], index: 5, kind: output, shape index: {1}]
  %6 = xla_tuple %s4, %s5
  %s7 = sld [smem:[#allocation0]]
  $region69: #{tpu_custom_call.1} parent=0
    _
  %s9 = ssub.s32 1, %s7
  %s10 = scalar_select 0, %s9, %s7
  %11 = sst [smem:[#allocation3]] %s0
  $region1: #{tpu_custom_call.1} parent=0
    #allocation4 [shape = 'u8[131072]{0}', space=vmem, size = 0x20000, scoped, tag = 'input window, operand 1']
    #allocation5 [shape = 's32[2]{0}', space=sflag, size = 0x8, scoped, tag = 'scoped memory for tpu_custom_call.1']
    #allocation6 [shape = 's32[2]{0}', space=sflag, size = 0x8, scoped, tag = 'scoped memory for tpu_custom_call.1']
    #allocation7 [shape = 'u8[32768]{0}', space=vmem, size = 0x8000, scoped, tag = 'output window, operand 0']
    #allocation8 [shape = 'u8[65536]{0}', space=vmem, size = 0x10000, scoped, tag = 'output window, operand 1']
    #allocation9 [shape = 's32[2]{0}', space=sflag, size = 0x8, scoped, tag = 'scoped memory for tpu_custom_call.1']
    %12 = vsyncpa [#allocation5], 0
    %s13 = scalar_lea.sflag [#allocation5], 1
    %14 = vsyncpa %s13, 0
    %15 = vsyncpa [#allocation6], 0
    %s16 = scalar_lea.sflag [#allocation6], 1
    %17 = vsyncpa %s16, 0
    %18 = vsyncpa [#allocation9], 0
    %s19 = scalar_lea.sflag [#allocation9], 1
    %20 = vsyncpa %s19, 0
    loop: start=0, step=1, limit=4
    $region2: #{tpu_custom_call.1} parent=1 // loop_pre_header
      _
    $region3: #{tpu_custom_call.1} parent=1 // loop_header
      %s22 = sphi 0, %s26
      %p23 = scmp.ge.s32.totalorder %s22, 4
      %s29 = sphi 0, %s41
      %s30 = sphi 0, %s37
      %s31 = sphi 0, %s29
      %s32 = sphi 0, %s30
      %s33 = sphi 0, %s31
      %s34 = sphi 0, %s32
      %s42 = sphi 0, %s42
      %s44 = sphi 0, %s42
      %s45 = sphi 0, %s44
      %s59 = sphi 0, %s45
      %s67 = sphi 0, %s69
      %s70 = sphi 0, %s67
      %s71 = sphi 0, %s70
      %s87 = sphi 0, %s71
      %s91 = sphi 0, %s91
      %s93 = sphi 0, %s91
      %s94 = sphi 0, %s93
      %s108 = sphi 0, %s94
      %s112 = sphi 0, %s112
      %s114 = sphi 0, %s112
      %s115 = sphi 0, %s114
      %s129 = sphi 0, %s115
      %s135 = sphi 0, %s137
      %s138 = sphi 0, %s135
      %s139 = sphi 0, %s138
      %s155 = sphi 0, %s139
      %s161 = sphi 0, %s163
      %s164 = sphi 0, %s161
      %s165 = sphi 0, %s164
      %s181 = sphi 0, %s165
    $region4: #{tpu_custom_call.1} parent=1 // loop_header_branch
      %25 = sbr.rel (%p23) target = $region8
    $region5: #{tpu_custom_call.1} parent=1 // loop_body
      %s27 = ssub.s32 %s22, 1
      %s28 = ssub.s32 %s22, 2
      %s35 = sadd.s32 1, %s30
      %p36 = scmp.ge.s32.totalorder %s35, 1
      %s37 = scalar_select %p36, 0, %s35
      %s38 = sadd.s32 1, %s29
      %s39 = scalar_select %p36, %s38, %s29
      %p40 = scmp.ge.s32.totalorder %s39, 2
      %s41 = scalar_select %p40, 0, %s39
      %s43 = sadd.s32 %s42, 1
      %p46 = scmp.eq.s32.totalorder %s22, 1
      %p47 = scmp.ne.s32.totalorder %s42, %s44
      %p48 = scmp.eq.s32.totalorder %s22, 0
      %p49 = por %p47, %p48
      %p50 = scmp.ne.s32.totalorder %s42, %s44
      %p51 = scmp.eq.s32.totalorder %s27, 1
      %p52 = por %p50, %p51
      %p53 = scmp.ne.s32.totalorder %s44, %s45
      %p54 = scmp.eq.s32.totalorder %s27, 0
      %p55 = por %p53, %p54
      %p56 = scmp.ne.s32.totalorder %s44, %s45
      %p57 = scmp.eq.s32.totalorder %s28, 1
      %p58 = por %p56, %p57
      %p60 = scmp.ne.s32.totalorder %s45, %s59
      %p61 = scmp.eq.s32.totalorder %s28, 0
      %p62 = por %p60, %p61
      %s63 = ssub.s32 %s29, %s41
      %s64 = ssub.s32 %s30, %s37
      %s65 = sor.u32 %s63, %s64
      %p66 = scmp.eq.s32.totalorder %s65, 0
      %s68 = sadd.s32 %s67, 1
      %s69 = scalar_select %p66, %s67, %s68
      %p72 = pneg %p66
      %p73 = scmp.eq.s32.totalorder %s22, 1
      %p74 = por %p72, %p73
      %p75 = scmp.ne.s32.totalorder %s67, %s70
      %p76 = scmp.eq.s32.totalorder %s22, 0
      %p77 = por %p75, %p76
      %p78 = scmp.ne.s32.totalorder %s67, %s70
      %p79 = scmp.eq.s32.totalorder %s27, 1
      %p80 = por %p78, %p79
      %p81 = scmp.ne.s32.totalorder %s70, %s71
      %p82 = scmp.eq.s32.totalorder %s27, 0
      %p83 = por %p81, %p82
      %p84 = scmp.ne.s32.totalorder %s70, %s71
      %p85 = scmp.eq.s32.totalorder %s28, 1
      %p86 = por %p84, %p85
      %p88 = scmp.ne.s32.totalorder %s71, %s87
      %p89 = scmp.eq.s32.totalorder %s28, 0
      %p90 = por %p88, %p89
      %s92 = sadd.s32 %s91, 1
      %p95 = scmp.eq.s32.totalorder %s22, 1
      %p96 = scmp.ne.s32.totalorder %s91, %s93
      %p97 = scmp.eq.s32.totalorder %s22, 0
      %p98 = por %p96, %p97
      %p99 = scmp.ne.s32.totalorder %s91, %s93
      %p100 = scmp.eq.s32.totalorder %s27, 1
      %p101 = por %p99, %p100
      %p102 = scmp.ne.s32.totalorder %s93, %s94
      %p103 = scmp.eq.s32.totalorder %s27, 0
      %p104 = por %p102, %p103
      %p105 = scmp.ne.s32.totalorder %s93, %s94
      %p106 = scmp.eq.s32.totalorder %s28, 1
      %p107 = por %p105, %p106
      %p109 = scmp.ne.s32.totalorder %s94, %s108
      %p110 = scmp.eq.s32.totalorder %s28, 0
      %p111 = por %p109, %p110
      %s113 = sadd.s32 %s112, 1
      %p116 = scmp.eq.s32.totalorder %s22, 1
      %p117 = scmp.ne.s32.totalorder %s112, %s114
      %p118 = scmp.eq.s32.totalorder %s22, 0
      %p119 = por %p117, %p118
      %p120 = scmp.ne.s32.totalorder %s112, %s114
      %p121 = scmp.eq.s32.totalorder %s27, 1
      %p122 = por %p120, %p121
      %p123 = scmp.ne.s32.totalorder %s114, %s115
      %p124 = scmp.eq.s32.totalorder %s27, 0
      %p125 = por %p123, %p124
      %p126 = scmp.ne.s32.totalorder %s114, %s115
      %p127 = scmp.eq.s32.totalorder %s28, 1
      %p128 = por %p126, %p127
      %p130 = scmp.ne.s32.totalorder %s115, %s129
      %p131 = scmp.eq.s32.totalorder %s28, 0
      %p132 = por %p130, %p131
      %s133 = ssub.s32 %s29, %s41
      %p134 = scmp.eq.s32.totalorder %s133, 0
      %s136 = sadd.s32 %s135, 1
      %s137 = scalar_select %p134, %s135, %s136
      %p140 = pneg %p134
      %p141 = scmp.eq.s32.totalorder %s22, 1
      %p142 = por %p140, %p141
      %p143 = scmp.ne.s32.totalorder %s135, %s138
      %p144 = scmp.eq.s32.totalorder %s22, 0
      %p145 = por %p143, %p144
      %p146 = scmp.ne.s32.totalorder %s135, %s138
      %p147 = scmp.eq.s32.totalorder %s27, 1
      %p148 = por %p146, %p147
      %p149 = scmp.ne.s32.totalorder %s138, %s139
      %p150 = scmp.eq.s32.totalorder %s27, 0
      %p151 = por %p149, %p150
      %p152 = scmp.ne.s32.totalorder %s138, %s139
      %p153 = scmp.eq.s32.totalorder %s28, 1
      %p154 = por %p152, %p153
      %p156 = scmp.ne.s32.totalorder %s139, %s155
      %p157 = scmp.eq.s32.totalorder %s28, 0
      %p158 = por %p156, %p157
      %s159 = ssub.s32 %s29, %s41
      %p160 = scmp.eq.s32.totalorder %s159, 0
      %s162 = sadd.s32 %s161, 1
      %s163 = scalar_select %p160, %s161, %s162
      %p166 = pneg %p160
      %p167 = scmp.eq.s32.totalorder %s22, 1
      %p168 = por %p166, %p167
      %p169 = scmp.ne.s32.totalorder %s161, %s164
      %p170 = scmp.eq.s32.totalorder %s22, 0
      %p171 = por %p169, %p170
      %p172 = scmp.ne.s32.totalorder %s161, %s164
      %p173 = scmp.eq.s32.totalorder %s27, 1
      %p174 = por %p172, %p173
      %p175 = scmp.ne.s32.totalorder %s164, %s165
      %p176 = scmp.eq.s32.totalorder %s27, 0
      %p177 = por %p175, %p176
      %p178 = scmp.ne.s32.totalorder %s164, %s165
      %p179 = scmp.eq.s32.totalorder %s28, 1
      %p180 = por %p178, %p179
      %p182 = scmp.ne.s32.totalorder %s165, %s181
      %p183 = scmp.eq.s32.totalorder %s28, 0
      %p184 = por %p182, %p183
      %p185 = scmp.le.s32.totalorder 1, %s22
      %p186 = scmp.lt.s32.totalorder %s22, 3
      %p187 = pnand %p185, %p186
      %p188 = pneg %p187
      // Predicated region
      $region9: #{tpu_custom_call.1} parent=5 // pred_check
        _
      $region10: #{tpu_custom_call.1} parent=5 // pred_check_branch
        %190 = sbr.rel (%p187) target = $region12
      $region11: #{tpu_custom_call.1} parent=5 // pred_region
        %s191 = ssub.s32 %s22, 1
        // Predicated region
        $region13: #{tpu_custom_call.1} parent=11 // pred_check
          %p192 = pneg %p55
        $region14: #{tpu_custom_call.1} parent=11 // pred_check_branch
          %194 = sbr.rel (%p192) target = $region16
        $region15: #{tpu_custom_call.1} parent=11 // pred_region
          _
        $region16: #{tpu_custom_call.1} parent=11 // pred_fallthru
          _
        // Predicated region
        $region17: #{tpu_custom_call.1} parent=11 // pred_check
          %p195 = pneg %p104
        $region18: #{tpu_custom_call.1} parent=11 // pred_check_branch
          %197 = sbr.rel (%p195) target = $region20
        $region19: #{tpu_custom_call.1} parent=11 // pred_region
          _
        $region20: #{tpu_custom_call.1} parent=11 // pred_fallthru
          _
        // Predicated region
        $region21: #{tpu_custom_call.1} parent=11 // pred_check
          %p198 = pneg %p125
        $region22: #{tpu_custom_call.1} parent=11 // pred_check_branch
          %200 = sbr.rel (%p198) target = $region24
        $region23: #{tpu_custom_call.1} parent=11 // pred_region
          _
        $region24: #{tpu_custom_call.1} parent=11 // pred_fallthru
          _
      $region12: #{tpu_custom_call.1} parent=5 // pred_fallthru
        _
      %p201 = scmp.lt.s32.totalorder %s22, 2
      // Predicated region
      $region25: #{tpu_custom_call.1} parent=5 // pred_check
        %p202 = pneg %p201
      $region26: #{tpu_custom_call.1} parent=5 // pred_check_branch
        %204 = sbr.rel (%p202) target = $region28
      $region27: #{tpu_custom_call.1} parent=5 // pred_region
        // Predicated region
        $region29: #{tpu_custom_call.1} parent=27 // pred_check
          %p205 = pneg %p77
        $region30: #{tpu_custom_call.1} parent=27 // pred_check_branch
          %207 = sbr.rel (%p205) target = $region32
        $region31: #{tpu_custom_call.1} parent=27 // pred_region
          %s208 = sand.u32 %s67, 1
          %s209 = scalar_lea.sflag [#allocation5], %s208
          %s210 = sand.u32 %s67, 1
          %s211 = smul.addr %s210, 128
          %s212 = scalar_lea.vmem [#allocation4], %s211
          %s213 = smul.u32 2, %s30
          %s215 = ssub.s32 2048, 2048
          %216 = vsyncadd %s209, %s215
          %s217 = smul.addr %s29, 16
          %s218 = sadd.s32 %s213, %s217
          %s219 = smul.addr %s218, 128
          %s220 = scalar_lea.hbm %s1, %s219
          %s221 = sshll.u32 %s212, 4
          %s222 = int_to_ptr.vmem [resolvable:$true] %s221
          %227 = dma.hbm_to_vmem [thread:$0]  %s220, 2048, %s222, %s209, 256, 256, 16
        $region32: #{tpu_custom_call.1} parent=27 // pred_fallthru
          _
      $region28: #{tpu_custom_call.1} parent=5 // pred_fallthru
        _
      %p228 = scmp.le.s32.totalorder 1, %s22
      %p229 = scmp.lt.s32.totalorder %s22, 3
      %p230 = pnand %p228, %p229
      %p231 = pneg %p230
      // Predicated region
      $region33: #{tpu_custom_call.1} parent=5 // pred_check
        _
      $region34: #{tpu_custom_call.1} parent=5 // pred_check_branch
        %233 = sbr.rel (%p230) target = $region36
      $region35: #{tpu_custom_call.1} parent=5 // pred_region
        %s234 = ssub.s32 %s22, 1
        %s235 = sand.u32 %s70, 1
        %s236 = scalar_lea.sflag [#allocation5], %s235
        %s237 = sand.u32 %s70, 1
        %s238 = smul.addr %s237, 128
        %s239 = scalar_lea.vmem [#allocation4], %s238
        // Predicated region
        $region37: #{tpu_custom_call.1} parent=35 // pred_check
          %p240 = pneg %p83
        $region38: #{tpu_custom_call.1} parent=35 // pred_check_branch
          %242 = sbr.rel (%p240) target = $region40
        $region39: #{tpu_custom_call.1} parent=35 // pred_region
          %243 = dma.done %s236, 2048
        $region40: #{tpu_custom_call.1} parent=35 // pred_fallthru
          _
        %p244 = pneg %p55
        %p245 = pneg %p52
        %s246 = sand.u32 %s70, 1
        %s247 = scalar_lea.sflag [#allocation5], %s246
        %s248 = sand.u32 %s70, 1
        %s249 = smul.addr %s248, 128
        %s250 = scalar_lea.vmem [#allocation4], %s249
        %p251 = pneg %p83
        %p252 = pneg %p80
        %p253 = pneg %p104
        %p254 = pneg %p101
        %p255 = pneg %p125
        %p256 = pneg %p122
        %p257 = pneg %p151
        %p258 = pneg %p148
        %s259 = sand.u32 %s138, 1
        %s260 = scalar_lea.sflag [#allocation6], %s259
        %s261 = sand.u32 %s138, 1
        %s262 = smul.addr %s261, 32
        %s263 = scalar_lea.vmem [#allocation7], %s262
        %p264 = pneg %p177
        %p265 = pneg %p174
        %s266 = sand.u32 %s164, 1
        %s267 = scalar_lea.sflag [#allocation9], %s266
        %s268 = sand.u32 %s164, 1
        %s269 = smul.addr %s268, 64
        %s270 = scalar_lea.vmem [#allocation8], %s269
        %s271 = smul.u32 2, %s32
        %p272 = scmp.eq.s32.totalorder %s32, 0
        // Predicated region
        $region41: #{tpu_custom_call.1} parent=35 // pred_check
          %p273 = pneg %p272
        $region42: #{tpu_custom_call.1} parent=35 // pred_check_branch
          %275 = sbr.rel (%p273) target = $region44
        $region43: #{tpu_custom_call.1} parent=35 // pred_region
          %vm276 = vcmask 261120
          %277 = vst.msk [vmem:[#allocation2] sm:$0xff] %vm276, 0.0
          %278 = vst.msk [vmem:[#allocation2 + $0x8] sm:$0xff] %vm276, 0.0
          %279 = vst.msk [vmem:[#allocation2 + $0x10] sm:$0xff] %vm276, 0.0
          %280 = vst.msk [vmem:[#allocation2 + $0x18] sm:$0xff] %vm276, 0.0
          %281 = vst.msk [vmem:[#allocation2 + $0x20] sm:$0xff] %vm276, 0.0
          %282 = vst.msk [vmem:[#allocation2 + $0x28] sm:$0xff] %vm276, 0.0
          %283 = vst.msk [vmem:[#allocation2 + $0x30] sm:$0xff] %vm276, 0.0
          %284 = vst.msk [vmem:[#allocation2 + $0x38] sm:$0xff] %vm276, 0.0
          %285 = vst [vmem:[%s270] sm:$0xff] 0.0
          %286 = vst [vmem:[%s270 + $0x8] sm:$0xff] 0.0
          %287 = vst [vmem:[%s270 + $0x10] sm:$0xff] 0.0
          %288 = vst [vmem:[%s270 + $0x18] sm:$0xff] 0.0
          %289 = vst [vmem:[%s270 + $0x20] sm:$0xff] 0.0
          %290 = vst [vmem:[%s270 + $0x28] sm:$0xff] 0.0
          %291 = vst [vmem:[%s270 + $0x30] sm:$0xff] 0.0
          %292 = vst [vmem:[%s270 + $0x38] sm:$0xff] 0.0
        $region44: #{tpu_custom_call.1} parent=35 // pred_fallthru
          _
        %v293 = vld [vmem:[%s239] sm:$0xff]
        %v294 = vld [vmem:[%s239 + $0x8] sm:$0xff]
        %v295 = vld [vmem:[%s239 + $0x10] sm:$0xff]
        %v296 = vld [vmem:[%s239 + $0x18] sm:$0xff]
        %v297 = vld [vmem:[%s239 + $0x20] sm:$0xff]
        %v298 = vld [vmem:[%s239 + $0x28] sm:$0xff]
        %v299 = vld [vmem:[%s239 + $0x30] sm:$0xff]
        %v300 = vld [vmem:[%s239 + $0x38] sm:$0xff]
        %v301 = vld [vmem:[%s239 + $0x40] sm:$0xff]
        %v302 = vld [vmem:[%s239 + $0x48] sm:$0xff]
        %v303 = vld [vmem:[%s239 + $0x50] sm:$0xff]
        %v304 = vld [vmem:[%s239 + $0x58] sm:$0xff]
        %v305 = vld [vmem:[%s239 + $0x60] sm:$0xff]
        %v306 = vld [vmem:[%s239 + $0x68] sm:$0xff]
        %v307 = vld [vmem:[%s239 + $0x70] sm:$0xff]
        %v308 = vld [vmem:[%s239 + $0x78] sm:$0xff]
        %v309 = vld [vmem:[%s2] sm:$0xff]
        %v310 = vld [vmem:[%s2 + $0x8] sm:$0xff]
        %v311 = vld [vmem:[%s2 + $0x10] sm:$0xff]
        %v312 = vld [vmem:[%s2 + $0x18] sm:$0xff]
        %v313 = vld [vmem:[%s3] sm:$0xff]
        %v314 = vld [vmem:[%s3 + $0x8] sm:$0xff]
        %v315 = vld [vmem:[%s3 + $0x10] sm:$0xff]
        %v316 = vld [vmem:[%s3 + $0x18] sm:$0xff]
        %318 = vset.pattern.permute.xlu0 0
        %319 = vperm.xlu0 %318, %v313
        %v320 = vpop.permute.xlu0 %319
        %323 = vset.pattern.permute.xlu0 0
        %324 = vperm.xlu0 %323, %v314
        %v325 = vpop.permute.xlu0 %324
        %328 = vset.pattern.permute.xlu0 0
        %329 = vperm.xlu0 %328, %v315
        %v330 = vpop.permute.xlu0 %329
        %333 = vset.pattern.permute.xlu0 0
        %334 = vperm.xlu0 %333, %v316
        %v335 = vpop.permute.xlu0 %334
        %vm337 = vcmask 523264
        %v339 = vsel %vm337, %v309, 0
        %v342 = vsel %vm337, %v310, 0
        %v345 = vsel %vm337, %v311, 0
        %v348 = vsel %vm337, %v312, 0
        %350 = vmatprep.subr.mxu0 %v294
        %351 = vmatpush1.msra.mxu0 %v293
        %352 = vmatprep.subr.mxu0 %v296
        %353 = vmatpush1.msra.mxu0 %v295
        %354 = vmatprep.subr.mxu0 %v298
        %355 = vmatpush1.msra.mxu0 %v297
        %356 = vmatprep.subr.mxu0 %v300
        %357 = vmatpush1.msra.mxu0 %v299
        %358 = vmatprep.subr.mxu0 %v302
        %359 = vmatpush1.msra.mxu0 %v301
        %360 = vmatprep.subr.mxu0 %v304
        %361 = vmatpush1.msra.mxu0 %v303
        %362 = vmatprep.subr.mxu0 %v306
        %363 = vmatpush1.msra.mxu0 %v305
        %364 = vmatprep.subr.mxu0 %v308
        %365 = vmatpush1.msra.mxu0 %v307
        %366 = vmatprep.subr.mxu0 0.0
        %367 = vmatpush1.msra.mxu0 0.0
        %368 = vmatprep.subr.mxu0 0.0
        %369 = vmatpush1.msra.mxu0 0.0
        %370 = vmatprep.subr.mxu0 0.0
        %371 = vmatpush1.msra.mxu0 0.0
        %372 = vmatprep.subr.mxu0 0.0
        %373 = vmatpush1.msra.mxu0 0.0
        %374 = vmatprep.subr.mxu0 0.0
        %375 = vmatpush1.msra.mxu0 0.0
        %376 = vmatprep.subr.mxu0 0.0
        %377 = vmatpush1.msra.mxu0 0.0
        %378 = vmatprep.subr.mxu0 0.0
        %379 = vmatpush1.msra.mxu0 0.0
        %380 = vmatprep.subr.mxu0 0.0
        %381 = vmatpush1.msra.mxu0 0.0
        %382 = vmatprep.subr.mxu0 0.0
        %383 = vmatpush1.msra.mxu0 0.0
        %384 = vmatprep.subr.mxu0 0.0
        %385 = vmatpush1.msra.mxu0 0.0
        %386 = vmatprep.subr.mxu0 0.0
        %387 = vmatpush1.msra.mxu0 0.0
        %388 = vmatprep.subr.mxu0 0.0
        %389 = vmatpush1.msra.mxu0 0.0
        %390 = vmatprep.subr.mxu0 0.0
        %391 = vmatpush1.msra.mxu0 0.0
        %392 = vmatprep.subr.mxu0 0.0
        %393 = vmatpush1.msra.mxu0 0.0
        %394 = vmatprep.subr.mxu0 0.0
        %395 = vmatpush1.msra.mxu0 0.0
        %396 = vmatprep.subr.mxu0 0.0
        %397 = vmatpush1.msra.mxu0 0.0
        %398 = vmatprep.subr.mxu0 0.0
        %399 = vmatpush1.msra.mxu0 0.0
        %400 = vmatprep.subr.mxu0 0.0
        %401 = vmatpush1.msra.mxu0 0.0
        %402 = vmatprep.subr.mxu0 0.0
        %403 = vmatpush1.msra.mxu0 0.0
        %404 = vmatprep.subr.mxu0 0.0
        %405 = vmatpush1.msra.mxu0 0.0
        %406 = vmatprep.subr.mxu0 0.0
        %407 = vmatpush1.msra.mxu0 0.0
        %408 = vmatprep.subr.mxu0 0.0
        %409 = vmatpush1.msra.mxu0 0.0
        %410 = vmatprep.subr.mxu0 0.0
        %411 = vmatpush1.msra.mxu0 0.0
        %412 = vmatprep.subr.mxu0 0.0
        %413 = vmatpush1.msra.mxu0 0.0
        %414 = vmatprep.mubr.f32.mxu0 0.0
        %415 = vmatmul.mubr.f32.gmra.mrb[0].mxu0 %v339
        %v416 = vpop.f32.mrb[0].mxu0
        %v417 = vadd.f32 %v320, %v416
        %v418 = vpop.f32.mrb[0].mxu0
        %v419 = vadd.f32 %v320, %v418
        %420 = vmatprep.mubr.f32.mxu0 0.0
        %421 = vmatmul.mubr.f32.gmra.mrb[0].mxu0 %v342
        %v422 = vpop.f32.mrb[0].mxu0
        %v423 = vadd.f32 %v325, %v422
        %v424 = vpop.f32.mrb[0].mxu0
        %v425 = vadd.f32 %v325, %v424
        %426 = vmatprep.mubr.f32.mxu0 0.0
        %427 = vmatmul.mubr.f32.gmra.mrb[0].mxu0 %v345
        %v428 = vpop.f32.mrb[0].mxu0
        %v429 = vadd.f32 %v330, %v428
        %v430 = vpop.f32.mrb[0].mxu0
        %v431 = vadd.f32 %v330, %v430
        %432 = vmatprep.mubr.f32.mxu0 0.0
        %433 = vmatmul.mubr.f32.gmra.mrb[0].mxu0 %v348
        %v434 = vpop.f32.mrb[0].mxu0
        %v435 = vadd.f32 %v335, %v434
        %v436 = vpop.f32.mrb[0].mxu0
        %v437 = vadd.f32 %v335, %v436
        %438 = vdwg.mxu0
        %v439 = vmax.f32 %v417, 0.0
        %v440 = vmax.f32 %v419, 0.0
        %v441 = vmax.f32 %v423, 0.0
        %v442 = vmax.f32 %v425, 0.0
        %v443 = vmax.f32 %v429, 0.0
        %v444 = vmax.f32 %v431, 0.0
        %v445 = vmax.f32 %v435, 0.0
        %v446 = vmax.f32 %v437, 0.0
        %v447 = vld [vmem:[#allocation2] sm:$0xff]
        %v448 = vld [vmem:[#allocation2 + $0x8] sm:$0xff]
        %v449 = vld [vmem:[#allocation2 + $0x10] sm:$0xff]
        %v450 = vld [vmem:[#allocation2 + $0x18] sm:$0xff]
        %v451 = vld [vmem:[#allocation2 + $0x20] sm:$0xff]
        %v452 = vld [vmem:[#allocation2 + $0x28] sm:$0xff]
        %v453 = vld [vmem:[#allocation2 + $0x30] sm:$0xff]
        %v454 = vld [vmem:[#allocation2 + $0x38] sm:$0xff]
        %455 = vmatprep.subr.mxu0 %v440
        %456 = vmatpush1.xpose.msra.mxu0 %v439
        %457 = vmatprep.subr.mxu0 %v442
        %458 = vmatpush1.xpose.msra.mxu0 %v441
        %459 = vmatprep.subr.mxu0 %v444
        %460 = vmatpush1.xpose.msra.mxu0 %v443
        %461 = vmatprep.subr.mxu0 %v446
        %462 = vmatpush1.xpose.msra.mxu0 %v445
        %463 = vmatprep.subr.mxu0 0.0
        %464 = vmatpush1.xpose.msra.mxu0 0.0
        %465 = vmatprep.subr.mxu0 0.0
        %466 = vmatpush1.xpose.msra.mxu0 0.0
        %467 = vmatprep.subr.mxu0 0.0
        %468 = vmatpush1.xpose.msra.mxu0 0.0
        %469 = vmatprep.subr.mxu0 0.0
        %470 = vmatpush1.xpose.msra.mxu0 0.0
        %471 = vmatprep.subr.mxu0 0.0
        %472 = vmatpush1.xpose.msra.mxu0 0.0
        %473 = vmatprep.subr.mxu0 0.0
        %474 = vmatpush1.xpose.msra.mxu0 0.0
        %475 = vmatprep.subr.mxu0 0.0
        %476 = vmatpush1.xpose.msra.mxu0 0.0
        %477 = vmatprep.subr.mxu0 0.0
        %478 = vmatpush1.xpose.msra.mxu0 0.0
        %479 = vmatprep.subr.mxu0 0.0
        %480 = vmatpush1.xpose.msra.mxu0 0.0
        %481 = vmatprep.subr.mxu0 0.0
        %482 = vmatpush1.xpose.msra.mxu0 0.0
        %483 = vmatprep.subr.mxu0 0.0
        %484 = vmatpush1.xpose.msra.mxu0 0.0
        %485 = vmatprep.subr.mxu0 0.0
        %486 = vmatpush1.xpose.msra.mxu0 0.0
        %487 = vmatprep.subr.mxu0 0.0
        %488 = vmatpush1.xpose.msra.mxu0 0.0
        %489 = vmatprep.subr.mxu0 0.0
        %490 = vmatpush1.xpose.msra.mxu0 0.0
        %491 = vmatprep.subr.mxu0 0.0
        %492 = vmatpush1.xpose.msra.mxu0 0.0
        %493 = vmatprep.subr.mxu0 0.0
        %494 = vmatpush1.xpose.msra.mxu0 0.0
        %495 = vmatprep.subr.mxu0 0.0
        %496 = vmatpush1.xpose.msra.mxu0 0.0
        %497 = vmatprep.subr.mxu0 0.0
        %498 = vmatpush1.xpose.msra.mxu0 0.0
        %499 = vmatprep.subr.mxu0 0.0
        %500 = vmatpush1.xpose.msra.mxu0 0.0
        %501 = vmatprep.subr.mxu0 0.0
        %502 = vmatpush1.xpose.msra.mxu0 0.0
        %503 = vmatprep.subr.mxu0 0.0
        %504 = vmatpush1.xpose.msra.mxu0 0.0
        %505 = vmatprep.subr.mxu0 0.0
        %506 = vmatpush1.xpose.msra.mxu0 0.0
        %507 = vmatprep.subr.mxu0 0.0
        %508 = vmatpush1.xpose.msra.mxu0 0.0
        %509 = vmatprep.subr.mxu0 0.0
        %510 = vmatpush1.xpose.msra.mxu0 0.0
        %511 = vmatprep.subr.mxu0 0.0
        %512 = vmatpush1.xpose.msra.mxu0 0.0
        %513 = vmatprep.subr.mxu0 0.0
        %514 = vmatpush1.xpose.msra.mxu0 0.0
        %515 = vmatprep.subr.mxu0 0.0
        %516 = vmatpush1.xpose.msra.mxu0 0.0
        %517 = vmatprep.subr.mxu0 0.0
        %518 = vmatpush1.xpose.msra.mxu0 0.0
        %519 = vmatprep.mubr.f32.mxu0 %v294
        %520 = vmatmul.mubr.f32.gmra.mrb[0].mxu0 %v293
        %v521 = vpop.f32.mrb[0].mxu0
        %v522 = vadd.f32 0.0, %v521
        %v523 = vpop.f32.mrb[0].mxu0
        %524 = vmatprep.mubr.f32.mxu0 %v296
        %525 = vmatmul.mubr.f32.gmra.mrb[0].mxu0 %v295
        %v526 = vpop.f32.mrb[0].mxu0
        %v527 = vadd.f32 0.0, %v526
        %v528 = vpop.f32.mrb[0].mxu0
        %529 = vmatprep.mubr.f32.mxu0 %v298
        %530 = vmatmul.mubr.f32.gmra.mrb[0].mxu0 %v297
        %v531 = vpop.f32.mrb[0].mxu0
        %v532 = vadd.f32 0.0, %v531
        %v533 = vpop.f32.mrb[0].mxu0
        %534 = vmatprep.mubr.f32.mxu0 %v300
        %535 = vmatmul.mubr.f32.gmra.mrb[0].mxu0 %v299
        %v536 = vpop.f32.mrb[0].mxu0
        %v537 = vadd.f32 0.0, %v536
        %v538 = vpop.f32.mrb[0].mxu0
        %539 = vmatprep.mubr.f32.mxu0 %v302
        %540 = vmatmul.mubr.f32.gmra.mrb[0].mxu0 %v301
        %v541 = vpop.f32.mrb[0].mxu0
        %v542 = vadd.f32 0.0, %v541
        %v543 = vpop.f32.mrb[0].mxu0
        %544 = vmatprep.mubr.f32.mxu0 %v304
        %545 = vmatmul.mubr.f32.gmra.mrb[0].mxu0 %v303
        %v546 = vpop.f32.mrb[0].mxu0
        %v547 = vadd.f32 0.0, %v546
        %v548 = vpop.f32.mrb[0].mxu0
        %549 = vmatprep.mubr.f32.mxu0 %v306
        %550 = vmatmul.mubr.f32.gmra.mrb[0].mxu0 %v305
        %v551 = vpop.f32.mrb[0].mxu0
        %v552 = vadd.f32 0.0, %v551
        %v553 = vpop.f32.mrb[0].mxu0
        %554 = vmatprep.mubr.f32.mxu0 %v308
        %555 = vmatmul.mubr.f32.gmra.mrb[0].mxu0 %v307
        %v556 = vpop.f32.mrb[0].mxu0
        %v557 = vadd.f32 0.0, %v556
        %v558 = vpop.f32.mrb[0].mxu0
        %559 = vdwg.mxu0
        %v560 = vadd.f32 %v447, %v522
        %v561 = vadd.f32 %v448, %v527
        %v562 = vadd.f32 %v449, %v532
        %v563 = vadd.f32 %v450, %v537
        %v564 = vadd.f32 %v451, %v542
        %v565 = vadd.f32 %v452, %v547
        %v566 = vadd.f32 %v453, %v552
        %v567 = vadd.f32 %v454, %v557
        %vm568 = vcmask 261120
        %569 = vst.msk [vmem:[#allocation2] sm:$0xff] %vm568, %v560
        %570 = vst.msk [vmem:[#allocation2 + $0x8] sm:$0xff] %vm568, %v561
        %571 = vst.msk [vmem:[#allocation2 + $0x10] sm:$0xff] %vm568, %v562
        %572 = vst.msk [vmem:[#allocation2 + $0x18] sm:$0xff] %vm568, %v563
        %573 = vst.msk [vmem:[#allocation2 + $0x20] sm:$0xff] %vm568, %v564
        %574 = vst.msk [vmem:[#allocation2 + $0x28] sm:$0xff] %vm568, %v565
        %575 = vst.msk [vmem:[#allocation2 + $0x30] sm:$0xff] %vm568, %v566
        %576 = vst.msk [vmem:[#allocation2 + $0x38] sm:$0xff] %vm568, %v567
        %v577 = vadd.f32 %v293, %v294
        %v578 = vadd.f32 %v295, %v296
        %v579 = vadd.f32 %v297, %v298
        %v580 = vadd.f32 %v299, %v300
        %v581 = vadd.f32 %v301, %v302
        %v582 = vadd.f32 %v303, %v304
        %v583 = vadd.f32 %v305, %v306
        %v584 = vadd.f32 %v307, %v308
        %v585 = vld [vmem:[%s270] sm:$0xff]
        %v586 = vld [vmem:[%s270 + $0x8] sm:$0xff]
        %v587 = vld [vmem:[%s270 + $0x10] sm:$0xff]
        %v588 = vld [vmem:[%s270 + $0x18] sm:$0xff]
        %v589 = vld [vmem:[%s270 + $0x20] sm:$0xff]
        %v590 = vld [vmem:[%s270 + $0x28] sm:$0xff]
        %v591 = vld [vmem:[%s270 + $0x30] sm:$0xff]
        %v592 = vld [vmem:[%s270 + $0x38] sm:$0xff]
        %v593 = vadd.f32 %v585, %v577
        %v594 = vadd.f32 %v586, %v578
        %v595 = vadd.f32 %v587, %v579
        %v596 = vadd.f32 %v588, %v580
        %v597 = vadd.f32 %v589, %v581
        %v598 = vadd.f32 %v590, %v582
        %v599 = vadd.f32 %v591, %v583
        %v600 = vadd.f32 %v592, %v584
        %601 = vst [vmem:[%s270] sm:$0xff] %v593
        %602 = vst [vmem:[%s270 + $0x8] sm:$0xff] %v594
        %603 = vst [vmem:[%s270 + $0x10] sm:$0xff] %v595
        %604 = vst [vmem:[%s270 + $0x18] sm:$0xff] %v596
        %605 = vst [vmem:[%s270 + $0x20] sm:$0xff] %v597
        %606 = vst [vmem:[%s270 + $0x28] sm:$0xff] %v598
        %607 = vst [vmem:[%s270 + $0x30] sm:$0xff] %v599
        %608 = vst [vmem:[%s270 + $0x38] sm:$0xff] %v600
        // Predicated region
        $region45: #{tpu_custom_call.1} parent=35 // pred_check
          %p609 = pneg %p272
        $region46: #{tpu_custom_call.1} parent=35 // pred_check_branch
          %611 = sbr.rel (%p609) target = $region48
        $region47: #{tpu_custom_call.1} parent=35 // pred_region
          %v612 = vld [vmem:[#allocation2] sm:$0xff]
          %v613 = vld [vmem:[#allocation2 + $0x8] sm:$0xff]
          %v614 = vld [vmem:[#allocation2 + $0x10] sm:$0xff]
          %v615 = vld [vmem:[#allocation2 + $0x18] sm:$0xff]
          %v616 = vld [vmem:[#allocation2 + $0x20] sm:$0xff]
          %v617 = vld [vmem:[#allocation2 + $0x28] sm:$0xff]
          %v618 = vld [vmem:[#allocation2 + $0x30] sm:$0xff]
          %v619 = vld [vmem:[#allocation2 + $0x38] sm:$0xff]
          %620 = vxpose.xlu0.b32.start [1/16] %v612, 128
          %621 = vxpose.xlu0.b32.cont [2/16] %v613, 128
          %622 = vxpose.xlu0.b32.cont [3/16] %v614, 128
          %623 = vxpose.xlu0.b32.cont [4/16] %v615, 128
          %624 = vxpose.xlu0.b32.cont [5/16] %v616, 128
          %625 = vxpose.xlu0.b32.cont [6/16] %v617, 128
          %626 = vxpose.xlu0.b32.cont [7/16] %v618, 128
          %627 = vxpose.xlu0.b32.cont [8/16] %v619, 128
          %628 = vxpose.xlu0.b32.cont [9/16] 0.0, 128
          %629 = vxpose.xlu0.b32.cont [10/16] 0.0, 128
          %630 = vxpose.xlu0.b32.cont [11/16] 0.0, 128
          %631 = vxpose.xlu0.b32.cont [12/16] 0.0, 128
          %632 = vxpose.xlu0.b32.cont [13/16] 0.0, 128
          %633 = vxpose.xlu0.b32.cont [14/16] 0.0, 128
          %634 = vxpose.xlu0.b32.cont [15/16] 0.0, 128
          %635 = vxpose.xlu0.b32.end [16/16] 0.0, 128
          %v636 = vpop.trf.xlu0
          %v637 = vpop.trf.xlu0
          %v638 = vpop.trf.xlu0
          %v639 = vpop.trf.xlu0
          %v640 = vpop.trf.xlu0
          %v641 = vpop.trf.xlu0
          %v642 = vpop.trf.xlu0
          %v643 = vpop.trf.xlu0
          %v644 = vpop.trf.xlu0
          %v645 = vpop.trf.xlu0
          %v646 = vpop.trf.xlu0
          %v647 = vpop.trf.xlu0
          %v648 = vpop.trf.xlu0
          %v649 = vpop.trf.xlu0
          %v650 = vpop.trf.xlu0
          %v651 = vpop.trf.xlu0
          %v652 = vsel %vm337, %v636, inf
          %653 = vmin.xlane.f32.xlu0 %v652
          %v654 = vpop.xlane.xlu0 %653
          %v655 = vsel %vm337, %v637, inf
          %656 = vmin.xlane.f32.xlu0 %v655
          %v657 = vpop.xlane.xlu0 %656
          %v658 = vsel %vm337, %v638, inf
          %659 = vmin.xlane.f32.xlu0 %v658
          %v660 = vpop.xlane.xlu0 %659
          %v661 = vsel %vm337, %v639, inf
          %662 = vmin.xlane.f32.xlu0 %v661
          %v663 = vpop.xlane.xlu0 %662
          %v664 = vsub.f32 %v654, %v636
          %v665 = vsub.f32 %v657, %v637
          %v666 = vsub.f32 %v660, %v638
          %v667 = vsub.f32 %v663, %v639
          %v668 = vmul.f32 %v664, 1.442695
          %v669 = vpow.pop %v668
          %v670 = vmul.f32 %v665, 1.442695
          %v671 = vpow.pop %v670
          %v672 = vmul.f32 %v666, 1.442695
          %v673 = vpow.pop %v672
          %v674 = vmul.f32 %v667, 1.442695
          %v675 = vpow.pop %v674
          %v676 = vsel %vm337, %v669, 0.0
          %677 = vadd.xlane.f32.xlu0 %v676
          %v678 = vpop.xlane.xlu0 %677
          %v679 = vsel %vm337, %v671, 0.0
          %680 = vadd.xlane.f32.xlu0 %v679
          %v681 = vpop.xlane.xlu0 %680
          %v682 = vsel %vm337, %v673, 0.0
          %683 = vadd.xlane.f32.xlu0 %v682
          %v684 = vpop.xlane.xlu0 %683
          %v685 = vsel %vm337, %v675, 0.0
          %686 = vadd.xlane.f32.xlu0 %v685
          %v687 = vpop.xlane.xlu0 %686
          %v688 = vrcp.pop %v678
          %v689 = vrcp.pop %v681
          %v690 = vrcp.pop %v684
          %v691 = vrcp.pop %v687
          %v692 = vmul.f32 %v669, %v688
          %v693 = vmul.f32 %v671, %v689
          %v694 = vmul.f32 %v673, %v690
          %v695 = vmul.f32 %v675, %v691
          %s696 = sld [smem:[#allocation3]]
          %v697 = vstv %s696
          %v698 = vmul.f32 %v697, %v692
          %v699 = vmul.f32 %v697, %v693
          %v700 = vmul.f32 %v697, %v694
          %v701 = vmul.f32 %v697, %v695
          %702 = vst.msk [vmem:[%s263] sm:$0xff] %vm337, %v698
          %703 = vst.msk [vmem:[%s263 + $0x8] sm:$0xff] %vm337, %v699
          %704 = vst.msk [vmem:[%s263 + $0x10] sm:$0xff] %vm337, %v700
          %705 = vst.msk [vmem:[%s263 + $0x18] sm:$0xff] %vm337, %v701
        $region48: #{tpu_custom_call.1} parent=35 // pred_fallthru
          _
        %s706 = sand.u32 %s138, 1
        %s707 = scalar_lea.sflag [#allocation6], %s706
        %s708 = sand.u32 %s138, 1
        %s709 = smul.addr %s708, 32
        %s710 = scalar_lea.vmem [#allocation7], %s709
        %s711 = sand.u32 %s164, 1
        %s712 = scalar_lea.sflag [#allocation9], %s711
        %s713 = sand.u32 %s164, 1
        %s714 = smul.addr %s713, 64
        %s715 = scalar_lea.vmem [#allocation8], %s714
        // Predicated region
        $region49: #{tpu_custom_call.1} parent=35 // pred_check
          %p716 = pneg %p148
        $region50: #{tpu_custom_call.1} parent=35 // pred_check_branch
          %718 = sbr.rel (%p716) target = $region52
        $region51: #{tpu_custom_call.1} parent=35 // pred_region
          %s720 = ssub.s32 512, 512
          %721 = vsyncadd %s707, %s720
          %s722 = smul.addr %s31, 4
          %s723 = smul.addr %s722, 128
          %s724 = scalar_lea.hbm %s4, %s723
          %s725 = sshll.u32 %s710, 4
          %s726 = int_to_ptr.vmem [resolvable:$true] %s725
          %731 = dma.vmem_to_hbm [thread:$0]  %s726, 512, %s724, %s707, 128, 128, 8
        $region52: #{tpu_custom_call.1} parent=35 // pred_fallthru
          _
        // Predicated region
        $region53: #{tpu_custom_call.1} parent=35 // pred_check
          %p732 = pneg %p174
        $region54: #{tpu_custom_call.1} parent=35 // pred_check_branch
          %734 = sbr.rel (%p732) target = $region56
        $region55: #{tpu_custom_call.1} parent=35 // pred_region
          %s736 = ssub.s32 1024, 1024
          %737 = vsyncadd %s712, %s736
          %s738 = smul.addr %s31, 8
          %s739 = smul.addr %s738, 128
          %s740 = scalar_lea.hbm %s5, %s739
          %s741 = sshll.u32 %s715, 4
          %s742 = int_to_ptr.vmem [resolvable:$true] %s741
          %747 = dma.vmem_to_hbm [thread:$0]  %s742, 1024, %s740, %s712, 128, 128, 8
        $region56: #{tpu_custom_call.1} parent=35 // pred_fallthru
          _
      $region36: #{tpu_custom_call.1} parent=5 // pred_fallthru
        _
      %p748 = scmp.le.s32.totalorder 2, %s22
      // Predicated region
      $region57: #{tpu_custom_call.1} parent=5 // pred_check
        %p749 = pneg %p748
      $region58: #{tpu_custom_call.1} parent=5 // pred_check_branch
        %751 = sbr.rel (%p749) target = $region60
      $region59: #{tpu_custom_call.1} parent=5 // pred_region
        %s752 = ssub.s32 %s22, 2
        // Predicated region
        $region61: #{tpu_custom_call.1} parent=59 // pred_check
          %p753 = pneg %p154
        $region62: #{tpu_custom_call.1} parent=59 // pred_check_branch
          %755 = sbr.rel (%p753) target = $region64
        $region63: #{tpu_custom_call.1} parent=59 // pred_region
          %s756 = sand.u32 %s139, 1
          %s757 = scalar_lea.sflag [#allocation6], %s756
          %s758 = sand.u32 %s139, 1
          %s759 = smul.addr %s758, 32
          %s760 = scalar_lea.vmem [#allocation7], %s759
          %761 = dma.done %s757, 512
        $region64: #{tpu_custom_call.1} parent=59 // pred_fallthru
          _
        // Predicated region
        $region65: #{tpu_custom_call.1} parent=59 // pred_check
          %p762 = pneg %p180
        $region66: #{tpu_custom_call.1} parent=59 // pred_check_branch
          %764 = sbr.rel (%p762) target = $region68
        $region67: #{tpu_custom_call.1} parent=59 // pred_region
          %s765 = sand.u32 %s165, 1
          %s766 = scalar_lea.sflag [#allocation9], %s765
          %s767 = sand.u32 %s165, 1
          %s768 = smul.addr %s767, 64
          %s769 = scalar_lea.vmem [#allocation8], %s768
          %770 = dma.done %s766, 1024
        $region68: #{tpu_custom_call.1} parent=59 // pred_fallthru
          _
      $region60: #{tpu_custom_call.1} parent=5 // pred_fallthru
        _
    $region6: #{tpu_custom_call.1} parent=1 // loop_footer
      %s26 = sadd.s32 1, %s22
    $region7: #{tpu_custom_call.1} parent=1 // loop_footer_branch
      %21 = sbr.rel target = $region3
    $region8: #{tpu_custom_call.1} parent=1 // loop_exit
      _
    %771 = vsyncpa [#allocation5], 1
    %s772 = scalar_lea.sflag [#allocation5], 1
    %773 = vsyncpa %s772, 1
    %774 = vsyncpa [#allocation6], 1
    %s775 = scalar_lea.sflag [#allocation6], 1
    %776 = vsyncpa %s775, 1
    %777 = vsyncpa [#allocation9], 1
    %s778 = scalar_lea.sflag [#allocation9], 1
    %779 = vsyncpa %s778, 1

</llo_original>
